<compile_context>
chip_gen: v7x
topology: tpu7x:2x2x1
jax: 0.10.0
libtpu: 0.0.40
codegen_flags: <defaults>
</compile_context>

<pallas_src>
import functools

import jax
import jax.numpy as jnp
import numpy as np
from jax.experimental import pallas as pl
from jax.experimental.pallas import tpu as pltpu

_EPS = 1e-10  # unused in the '_springs' branch (kept for parity with PyTorch)

# '_springs' interaction type constants (see SimulationDecoder.__init__)
INTERACTION_STRENGTH = 0.1
SAMPLE_FREQ = 1
DELTA_T = 0.1
BOX_SIZE = 5.0

# Normalization constants (constructor args loc_max/loc_min/vel_max/vel_min)
LOC_MAX, LOC_MIN = 5.0, -5.0
VEL_MAX, VEL_MIN = 2.0, -2.0

# TODO(synk): only the '_springs' simulation branch is implemented; the
# '_charged'/'_charged_short' branch (pairwise_sq_dist, set_diag_to_one,
# force clipping at +-max_F) is not reproduced here.


def _sim_decoder_kernel(edges_ref, state_ref, out_ref):
    """One batch block: springs simulation on [Bblk, 2, N, 2T] state."""
    # Hoisted once per block (outside the SAMPLE_FREQ loop: F is constant).
    F = -INTERACTION_STRENGTH * edges_ref[...]         # [Bblk, N, N]
    S = jnp.sum(F, axis=2, keepdims=True)              # [Bblk, N, 1] rowsum(F)

    loc = state_ref[:, 0]                              # [Bblk, N, 2T]  (x || y)
    vel = state_ref[:, 1]                              # [Bblk, N, 2T]  (vx || vy)

    # unnormalize
    loc = 0.5 * (loc + 1.0) * (LOC_MAX - LOC_MIN) + LOC_MIN
    vel = 0.5 * (vel + 1.0) * (VEL_MAX - VEL_MIN) + VEL_MIN

    for _ in range(SAMPLE_FREQ):                       # static, unrolled (=1)
        # f[b,i,t] = sum_j F[b,i,j]*(loc[b,i,t]-loc[b,j,t])
        #          = loc[b,i,t]*S[b,i] - (F[b] @ loc[b])[i,t]
        # One MXU matmul per batch element covers both x and y columns.
        forces = loc * S - jnp.einsum('bij,bjt->bit', F, loc,
                                      preferred_element_type=jnp.float32)

        vel = vel + DELTA_T * forces
        loc = loc + DELTA_T * vel

        # reflecting-box clamp (same box for x and y components)
        over = loc > BOX_SIZE
        loc = jnp.where(over, 2.0 * BOX_SIZE - loc, loc)
        vel = jnp.where(over, -jnp.abs(vel), vel)
        under = loc < -BOX_SIZE
        loc = jnp.where(under, -2.0 * BOX_SIZE - loc, loc)
        vel = jnp.where(under, jnp.abs(vel), vel)

    # renormalize (multiply by precomputed reciprocal constants, no vdiv)
    loc = (loc - LOC_MIN) * (2.0 / (LOC_MAX - LOC_MIN)) - 1.0
    vel = (vel - VEL_MIN) * (2.0 / (VEL_MAX - VEL_MIN)) - 1.0

    # lane-dense (2T on lanes), full-width stores
    out_ref[:, 0] = loc
    out_ref[:, 1] = vel


def _build_edges(relations: jnp.ndarray, num_atoms: int) -> jnp.ndarray:
    """relations[:, :, 1] -> dense [B, N, N] edge matrix with zero diagonal.

    Pad+reshape trick (no scatter):
      v[B, N*(N-1)] -> [B, N-1, N] -> append zero col -> [B, N-1, N+1]
                    -> flatten -> prepend zero -> [B, N*N] -> [B, N, N].
    """
    rel = relations[:, :, 1].astype(jnp.float32)            # [B, N*(N-1)]
    B = rel.shape[0]
    N = num_atoms
    v = rel.reshape(B, N - 1, N)
    v = jnp.pad(v, ((0, 0), (0, 0), (0, 1)))                # [B, N-1, N+1]
    v = v.reshape(B, (N - 1) * (N + 1))                     # [B, N*N - 1]
    v = jnp.pad(v, ((0, 0), (1, 0)))                        # [B, N*N]
    return v.reshape(B, N, N)


def _pick_batch_block(B: int, per_b_bytes: int, target_bytes: int = 2 << 20) -> int:
    """Largest divisor of B such that one block is ~target_bytes and grid >= 2."""
    cap = max(1, int(target_bytes // max(per_b_bytes, 1)))
    if B >= 2:
        cap = min(cap, B // 2)   # keep grid >= 2 so both v7x TensorCores get work
    cap = max(1, min(cap, B))
    for bblk in range(cap, 0, -1):
        if B % bblk == 0:
            return bblk
    return 1


@functools.partial(jax.jit, static_argnames=("pred_steps",))
def simulation_decoder_forward(inputs, relations, rel_rec=None, rel_send=None,
                               pred_steps=1):
    """Pallas implementation of SimulationDecoder.forward ('_springs' suffix).

    inputs    : [B, N, T_in, 4]  (loc_x, loc_y, vel_x, vel_y), normalized
    relations : [B, N*(N-1), 2]
    rel_rec / rel_send / pred_steps: unused by the reference forward pass.
    returns   : [B, N, T_in-1, 4]
    """
    del rel_rec, rel_send, pred_steps
    inputs = inputs.astype(jnp.float32)
    B, N, T_in, _ = inputs.shape
    T = T_in - 1

    # [B, N, T_in, 4] -> drop last timestep -> pack into [B, 2, N, 2T]:
    #   channel 0 = [loc_x || loc_y] along lanes, channel 1 = [vel_x || vel_y].
    s = jnp.moveaxis(inputs[:, :, :T, :], 3, 1)                    # [B, 4, N, T]
    loc = jnp.moveaxis(s[:, 0:2], 1, 2).reshape(B, N, 2 * T)       # [B, N, 2T]
    vel = jnp.moveaxis(s[:, 2:4], 1, 2).reshape(B, N, 2 * T)       # [B, N, 2T]
    state = jnp.stack([loc, vel], axis=1)                          # [B, 2, N, 2T]

    edges = _build_edges(relations, N)                             # [B, N, N]

    # f32 bytes per batch element: state + output + edges
    per_b_bytes = (2 * (2 * N * 2 * T) + N * N) * 4
    bblk = _pick_batch_block(B, per_b_bytes)

    out_state = pl.pallas_call(
        _sim_decoder_kernel,
        out_shape=jax.ShapeDtypeStruct((B, 2, N, 2 * T), jnp.float32),
        grid_spec=pltpu.PrefetchScalarGridSpec(
            num_scalar_prefetch=0,
            grid=(B // bblk,),
            in_specs=[
                pl.BlockSpec((bblk, N, N), lambda b: (b, 0, 0)),
                pl.BlockSpec((bblk, 2, N, 2 * T), lambda b: (b, 0, 0, 0)),
            ],
            out_specs=pl.BlockSpec((bblk, 2, N, 2 * T), lambda b: (b, 0, 0, 0)),
        ),
        compiler_params=pltpu.CompilerParams(
            dimension_semantics=("parallel",),
            vmem_limit_bytes=48 * 1024 * 1024),
    )(edges, state)

    # [B, 2, N, 2T] -> [B, N, T, 4]
    loc_o = jnp.moveaxis(out_state[:, 0].reshape(B, N, 2, T), 2, 3)  # [B,N,T,2]
    vel_o = jnp.moveaxis(out_state[:, 1].reshape(B, N, 2, T), 2, 3)  # [B,N,T,2]
    return jnp.concatenate([loc_o, vel_o], axis=-1)


# ----------------------------------------------------------------------------
# Pure-JAX reference (mirrors the PyTorch '_springs' branch) for validation.
# ----------------------------------------------------------------------------
def _build_edges_scatter(relations, num_atoms):
    rel = relations[:, :, 1].astype(jnp.float32)
    B = rel.shape[0]
    idx = jnp.asarray([i * num_atoms + j
                       for i in range(num_atoms)
                       for j in range(num_atoms) if i != j], dtype=jnp.int32)
    edges = jnp.zeros((B, num_atoms * num_atoms), jnp.float32)
    edges = edges.at[:, idx].set(rel)
    return edges.reshape(B, num_atoms, num_atoms)


def _reference_forward(inputs, relations):
    inputs = inputs.astype(jnp.float32)
    B, N, T_in, _ = inputs.shape
    T = T_in - 1
    loc = jnp.transpose(inputs[:, :, :-1, :2], (0, 2, 1, 3)).reshape(B * T, N, 2)
    vel = jnp.transpose(inputs[:, :, :-1, 2:], (0, 2, 1, 3)).reshape(B * T, N, 2)
    loc = 0.5 * (loc + 1) * (LOC_MAX - LOC_MIN) + LOC_MIN
    vel = 0.5 * (vel + 1) * (VEL_MAX - VEL_MIN) + VEL_MIN
    edges = _build_edges_scatter(relations, N)               # [B, N, N]
    for _ in range(SAMPLE_FREQ):
        x = loc[:, :, 0:1]
        y = loc[:, :, 1:2]
        dist_x = x - jnp.swapaxes(x, 1, 2)                   # [BT, N, N]
        dist_y = y - jnp.swapaxes(y, 1, 2)
        forces_size = -INTERACTION_STRENGTH * edges          # [B, N, N]
        pair_dist = jnp.stack([dist_x, dist_y], -1).reshape(B, T, N, N, 2)
        forces = jnp.sum(forces_size[:, None, :, :, None] * pair_dist, axis=3)
        forces = forces.reshape(B * T, N, 2)
        vel = vel + DELTA_T * forces
        loc = loc + DELTA_T * vel
        over = loc > BOX_SIZE
        loc = jnp.where(over, 2 * BOX_SIZE - loc, loc)
        vel = jnp.where(over, -jnp.abs(vel), vel)
        under = loc < -BOX_SIZE
        loc = jnp.where(under, -2 * BOX_SIZE - loc, loc)
        vel = jnp.where(under, jnp.abs(vel), vel)
    loc = 2 * (loc - LOC_MIN) / (LOC_MAX - LOC_MIN) - 1
    vel = 2 * (vel - VEL_MIN) / (VEL_MAX - VEL_MIN) - 1
    loc = jnp.transpose(loc.reshape(B, T, N, 2), (0, 2, 1, 3))
    vel = jnp.transpose(vel.reshape(B, T, N, 2), (0, 2, 1, 3))
    return jnp.concatenate([loc, vel], axis=-1)


if __name__ == "__main__":
    key = jax.random.PRNGKey(0)
    B, N, T_in = 2, 5, 8                      # batch, atoms, timesteps
    k1, k2 = jax.random.split(key)

    # inputs in normalized range ~[-1, 1]; relations are soft edge probabilities.
    inputs = jax.random.uniform(k1, (B, N, T_in, 4), jnp.float32,
                                minval=-1.0, maxval=1.0)
    relations = jax.random.uniform(k2, (B, N * (N - 1), 2), jnp.float32)

    out = simulation_decoder_forward(inputs, relations)
    out = jax.block_until_ready(out)

    ref = jax.block_until_ready(_reference_forward(inputs, relations))
    assert out.shape == (B, N, T_in - 1, 4), out.shape
    np.testing.assert_allclose(np.asarray(out), np.asarray(ref),
                               rtol=1e-5, atol=1e-5)
    print("KERNEL_OK")
</pallas_src>

<mosaic_0001>
module attributes {stable_mosaic.version = 11 : i64} {
  func.func @_sim_decoder_kernel(%arg0: i32, %arg1: memref<1x5x5xf32, #tpu.memory_space<vmem>>, %arg2: memref<1x2x5x14xf32, #tpu.memory_space<vmem>>, %arg3: memref<1x2x5x14xf32, #tpu.memory_space<vmem>>) attributes {dimension_semantics = [#tpu.dimension_semantics<parallel>], iteration_bounds = array<i64: 2>, scalar_prefetch = 0 : i64, scratch_operands = 0 : i64, tpu.core_type = #tpu.core_type<tc>, window_params = [{transform_indices = @transform_0, window_bounds = array<i64: 1, 5, 5>}, {transform_indices = @transform_1, window_bounds = array<i64: 1, 2, 5, 14>}, {transform_indices = @transform_2, window_bounds = array<i64: 1, 2, 5, 14>}]} {
    %c0 = arith.constant 0 : index
    %c0_0 = arith.constant 0 : index
    %c0_1 = arith.constant 0 : index
    %0 = vector.load %arg1[%c0, %c0_0, %c0_1] : memref<1x5x5xf32, #tpu.memory_space<vmem>>, vector<1x5x5xf32>
    %cst = arith.constant -1.000000e-01 : f32
    %1 = vector.broadcast %cst : f32 to vector<1x5x5xf32>
    %2 = arith.mulf %1, %0 : vector<1x5x5xf32>
    %cst_2 = arith.constant dense<0.000000e+00> : vector<1x5xf32>
    %3 = vector.multi_reduction <add>, %2, %cst_2 [2] : vector<1x5x5xf32> to vector<1x5xf32>
    %4 = vector.shape_cast %3 : vector<1x5xf32> to vector<1x5x1xf32>
    %c0_3 = arith.constant 0 : index
    %c0_4 = arith.constant 0 : index
    %c0_5 = arith.constant 0 : index
    %c0_6 = arith.constant 0 : index
    %5 = vector.load %arg2[%c0_3, %c0_4, %c0_5, %c0_6] : memref<1x2x5x14xf32, #tpu.memory_space<vmem>>, vector<1x1x5x14xf32>
    %6 = vector.shape_cast %5 : vector<1x1x5x14xf32> to vector<1x5x14xf32>
    %c0_7 = arith.constant 0 : index
    %c1 = arith.constant 1 : index
    %c0_8 = arith.constant 0 : index
    %c0_9 = arith.constant 0 : index
    %7 = vector.load %arg2[%c0_7, %c1, %c0_8, %c0_9] : memref<1x2x5x14xf32, #tpu.memory_space<vmem>>, vector<1x1x5x14xf32>
    %8 = vector.shape_cast %7 : vector<1x1x5x14xf32> to vector<1x5x14xf32>
    %cst_10 = arith.constant 1.000000e+00 : f32
    %9 = vector.broadcast %cst_10 : f32 to vector<1x5x14xf32>
    %10 = arith.addf %6, %9 : vector<1x5x14xf32>
    %cst_11 = arith.constant 5.000000e-01 : f32
    %11 = vector.broadcast %cst_11 : f32 to vector<1x5x14xf32>
    %12 = arith.mulf %11, %10 : vector<1x5x14xf32>
    %cst_12 = arith.constant 1.000000e+01 : f32
    %13 = vector.broadcast %cst_12 : f32 to vector<1x5x14xf32>
    %14 = arith.mulf %12, %13 : vector<1x5x14xf32>
    %cst_13 = arith.constant -5.000000e+00 : f32
    %15 = vector.broadcast %cst_13 : f32 to vector<1x5x14xf32>
    %16 = arith.addf %14, %15 : vector<1x5x14xf32>
    %cst_14 = arith.constant 1.000000e+00 : f32
    %17 = vector.broadcast %cst_14 : f32 to vector<1x5x14xf32>
    %18 = arith.addf %8, %17 : vector<1x5x14xf32>
    %cst_15 = arith.constant 5.000000e-01 : f32
    %19 = vector.broadcast %cst_15 : f32 to vector<1x5x14xf32>
    %20 = arith.mulf %19, %18 : vector<1x5x14xf32>
    %cst_16 = arith.constant 4.000000e+00 : f32
    %21 = vector.broadcast %cst_16 : f32 to vector<1x5x14xf32>
    %22 = arith.mulf %20, %21 : vector<1x5x14xf32>
    %cst_17 = arith.constant -2.000000e+00 : f32
    %23 = vector.broadcast %cst_17 : f32 to vector<1x5x14xf32>
    %24 = arith.addf %22, %23 : vector<1x5x14xf32>
    %25 = vector.broadcast %4 : vector<1x5x1xf32> to vector<1x5x14xf32>
    %26 = arith.mulf %16, %25 : vector<1x5x14xf32>
    "tpu.trace_start"() <{level = 10 : i32, message = "bij,bjt->bit"}> : () -> ()
    %cst_18 = arith.constant dense<0.000000e+00> : vector<1x5x14xf32>
    %27 = tpu.matmul %2, %16, %cst_18 {dimension_numbers = #tpu.dot_dimension_numbers<[2], [1], [1], [2], [0, 0, 0, 1, 1, 2], [0], [0]>} : vector<1x5x5xf32>, vector<1x5x14xf32>, vector<1x5x14xf32> -> vector<1x5x14xf32>
    "tpu.trace_stop"() : () -> ()
    %28 = arith.subf %26, %27 : vector<1x5x14xf32>
    %cst_19 = arith.constant 1.000000e-01 : f32
    %29 = vector.broadcast %cst_19 : f32 to vector<1x5x14xf32>
    %30 = arith.mulf %29, %28 : vector<1x5x14xf32>
    %31 = arith.addf %24, %30 : vector<1x5x14xf32>
    %cst_20 = arith.constant 1.000000e-01 : f32
    %32 = vector.broadcast %cst_20 : f32 to vector<1x5x14xf32>
    %33 = arith.mulf %32, %31 : vector<1x5x14xf32>
    %34 = arith.addf %16, %33 : vector<1x5x14xf32>
    %cst_21 = arith.constant 5.000000e+00 : f32
    %35 = vector.broadcast %cst_21 : f32 to vector<1x5x14xf32>
    %36 = arith.cmpf ogt, %34, %35 : vector<1x5x14xf32>
    %cst_22 = arith.constant 1.000000e+01 : f32
    %37 = vector.broadcast %cst_22 : f32 to vector<1x5x14xf32>
    %38 = arith.subf %37, %34 : vector<1x5x14xf32>
    %39 = arith.select %36, %38, %34 : vector<1x5x14xi1>, vector<1x5x14xf32>
    %40 = math.absf %31 : vector<1x5x14xf32>
    %cst_23 = arith.constant 0.000000e+00 : f32
    %41 = vector.broadcast %cst_23 : f32 to vector<1x5x14xf32>
    %42 = arith.subf %41, %40 : vector<1x5x14xf32>
    %43 = arith.select %36, %42, %31 : vector<1x5x14xi1>, vector<1x5x14xf32>
    %cst_24 = arith.constant -5.000000e+00 : f32
    %44 = vector.broadcast %cst_24 : f32 to vector<1x5x14xf32>
    %45 = arith.cmpf olt, %39, %44 : vector<1x5x14xf32>
    %cst_25 = arith.constant -1.000000e+01 : f32
    %46 = vector.broadcast %cst_25 : f32 to vector<1x5x14xf32>
    %47 = arith.subf %46, %39 : vector<1x5x14xf32>
    %48 = arith.select %45, %47, %39 : vector<1x5x14xi1>, vector<1x5x14xf32>
    %49 = math.absf %43 : vector<1x5x14xf32>
    %50 = arith.select %45, %49, %43 : vector<1x5x14xi1>, vector<1x5x14xf32>
    %cst_26 = arith.constant -5.000000e+00 : f32
    %51 = vector.broadcast %cst_26 : f32 to vector<1x5x14xf32>
    %52 = arith.subf %48, %51 : vector<1x5x14xf32>
    %cst_27 = arith.constant 2.000000e-01 : f32
    %53 = vector.broadcast %cst_27 : f32 to vector<1x5x14xf32>
    %54 = arith.mulf %52, %53 : vector<1x5x14xf32>
    %cst_28 = arith.constant 1.000000e+00 : f32
    %55 = vector.broadcast %cst_28 : f32 to vector<1x5x14xf32>
    %56 = arith.subf %54, %55 : vector<1x5x14xf32>
    %cst_29 = arith.constant -2.000000e+00 : f32
    %57 = vector.broadcast %cst_29 : f32 to vector<1x5x14xf32>
    %58 = arith.subf %50, %57 : vector<1x5x14xf32>
    %cst_30 = arith.constant 5.000000e-01 : f32
    %59 = vector.broadcast %cst_30 : f32 to vector<1x5x14xf32>
    %60 = arith.mulf %58, %59 : vector<1x5x14xf32>
    %cst_31 = arith.constant 1.000000e+00 : f32
    %61 = vector.broadcast %cst_31 : f32 to vector<1x5x14xf32>
    %62 = arith.subf %60, %61 : vector<1x5x14xf32>
    %c0_32 = arith.constant 0 : index
    %c0_33 = arith.constant 0 : index
    %c0_34 = arith.constant 0 : index
    %c0_35 = arith.constant 0 : index
    %63 = vector.load %arg3[%c0_32, %c0_33, %c0_34, %c0_35] : memref<1x2x5x14xf32, #tpu.memory_space<vmem>>, vector<1x1x5x14xf32>
    %64 = vector.shape_cast %63 : vector<1x1x5x14xf32> to vector<1x5x14xf32>
    %65 = vector.shape_cast %56 : vector<1x5x14xf32> to vector<1x1x5x14xf32>
    tpu.vector_store %arg3[%c0_32, %c0_33, %c0_34, %c0_35], %65 {strides = array<i32>} : memref<1x2x5x14xf32, #tpu.memory_space<vmem>>, vector<1x1x5x14xf32>,
    %c0_36 = arith.constant 0 : index
    %c1_37 = arith.constant 1 : index
    %c0_38 = arith.constant 0 : index
    %c0_39 = arith.constant 0 : index
    %66 = vector.load %arg3[%c0_36, %c1_37, %c0_38, %c0_39] : memref<1x2x5x14xf32, #tpu.memory_space<vmem>>, vector<1x1x5x14xf32>
    %67 = vector.shape_cast %66 : vector<1x1x5x14xf32> to vector<1x5x14xf32>
    %68 = vector.shape_cast %62 : vector<1x5x14xf32> to vector<1x1x5x14xf32>
    tpu.vector_store %arg3[%c0_36, %c1_37, %c0_38, %c0_39], %68 {strides = array<i32>} : memref<1x2x5x14xf32, #tpu.memory_space<vmem>>, vector<1x1x5x14xf32>,
    return
  }
  func.func @transform_0(%arg0: i32) -> (i32, i32, i32) {
    %c0_i32 = arith.constant 0 : i32
    %c0_i32_0 = arith.constant 0 : i32
    %c0_i32_1 = arith.constant 0 : i32
    return %arg0, %c0_i32, %c0_i32_0 : i32, i32, i32
  }
  func.func @transform_1(%arg0: i32) -> (i32, i32, i32, i32) {
    %c0_i32 = arith.constant 0 : i32
    %c0_i32_0 = arith.constant 0 : i32
    %c0_i32_1 = arith.constant 0 : i32
    %c0_i32_2 = arith.constant 0 : i32
    return %arg0, %c0_i32, %c0_i32_0, %c0_i32_1 : i32, i32, i32, i32
  }
  func.func @transform_2(%arg0: i32) -> (i32, i32, i32, i32) {
    %c0_i32 = arith.constant 0 : i32
    %c0_i32_0 = arith.constant 0 : i32
    %c0_i32_1 = arith.constant 0 : i32
    %c0_i32_2 = arith.constant 0 : i32
    return %arg0, %c0_i32, %c0_i32_0, %c0_i32_1 : i32, i32, i32, i32
  }
}

</mosaic_0001>

<llo_original>
// kernel: squeeze.3
$region0: #{squeeze.3}
  %s0 = inlined_call_operand.vmem [shape: f32[2,20], index: 0, kind: input, shape index: {}]
  %s1 = inlined_call_operand.vmem [shape: f32[2,4,5], index: 1, kind: output, shape index: {}]
  $region1: #{squeeze.3} parent=0
    #allocation0 [shape = 'u8[8192]{0}', space=vmem, size = 0x2000, scoped, tag = 'scoped mem for output reshape']
    #allocation1 [shape = 'u8[4096]{0}', space=vmem, size = 0x1000, scoped, tag = 'scoped mem for input reshape']
    %s3 = sshllo.u32 0, 2
    %v4 = vld [vmem:[%s0] sm:%s3]
    %5 = vst [vmem:[#allocation1] sm:%s3] %v4
    %v6 = vld [vmem:[#allocation1] sm:$0x3]
    %vm7 = vcmask 39936
    %8 = vst.msk [vmem:[#allocation0] ss:$8 sm:$0x3] %vm7, %v6
    %v9 = vld [vmem:[#allocation1] sm:$0x3]
    %10 = vrot.lane.b32.xlu0 %v9, 123
    %v11 = vpop.permute.xlu0 %10
    %vm12 = vcmask 39936
    %s13 = scalar_lea.vmem [#allocation0], 1
    %14 = vst.msk [vmem:[%s13] ss:$8 sm:$0x3] %vm12, %v11
    %v15 = vld [vmem:[#allocation1] sm:$0x3]
    %16 = vrot.lane.b32.xlu0 %v15, 118
    %v17 = vpop.permute.xlu0 %16
    %vm18 = vcmask 39936
    %s19 = scalar_lea.vmem [#allocation0], 2
    %20 = vst.msk [vmem:[%s19] ss:$8 sm:$0x3] %vm18, %v17
    %v21 = vld [vmem:[#allocation1] sm:$0x3]
    %22 = vrot.lane.b32.xlu0 %v21, 113
    %v23 = vpop.permute.xlu0 %22
    %vm24 = vcmask 39936
    %s25 = scalar_lea.vmem [#allocation0], 3
    %26 = vst.msk [vmem:[%s25] ss:$8 sm:$0x3] %vm24, %v23
    %s28 = sshllo.u32 0, 4
    %v30 = vld [vmem:[#allocation0] sm:%s28]
    %s31 = sshllo.u32 0, 4
    %32 = vst [vmem:[%s1] sm:%s31] %v30
    %s33 = scalar_lea.vmem [#allocation0], 8
    %v34 = vld [vmem:[%s33] sm:%s28]
    %s35 = sshllo.u32 0, 4
    %s36 = scalar_lea.vmem %s1, 4
    %37 = vst [vmem:[%s36] sm:%s35] %v34

// kernel: squeeze.4
$region0: #{squeeze.4}
  %s0 = inlined_call_operand.vmem [shape: f32[2,1,5,14], index: 0, kind: input, shape index: {}]
  %s1 = inlined_call_operand.vmem [shape: f32[2,5,2,7], index: 1, kind: output, shape index: {}]
  $region1: #{squeeze.4} parent=0
    #allocation0 [shape = 'u8[40960]{0}', space=vmem, size = 0xa000, scoped, tag = 'scoped mem for output reshape']
    #allocation1 [shape = 'u8[20480]{0}', space=vmem, size = 0x5000, scoped, tag = 'scoped mem for input reshape']
    %s3 = sshllo.u32 0, 2
    %s4 = smul.addr 2, 4
    %s5 = scalar_lea.vmem %s0, %s4
    %v6 = vld [vmem:[%s5] sm:%s3]
    %s7 = scalar_lea.vmem [#allocation1], 32
    %8 = vst [vmem:[%s7] sm:%s3] %v6
    %s9 = smul.addr 2, 3
    %s10 = scalar_lea.vmem %s0, %s9
    %v11 = vld [vmem:[%s10] sm:%s3]
    %s12 = scalar_lea.vmem [#allocation1], 24
    %13 = vst [vmem:[%s12] sm:%s3] %v11
    %s14 = smul.addr 2, 2
    %s15 = scalar_lea.vmem %s0, %s14
    %v16 = vld [vmem:[%s15] sm:%s3]
    %s17 = scalar_lea.vmem [#allocation1], 16
    %18 = vst [vmem:[%s17] sm:%s3] %v16
    %s19 = scalar_lea.vmem %s0, 2
    %v20 = vld [vmem:[%s19] sm:%s3]
    %s21 = scalar_lea.vmem [#allocation1], 8
    %22 = vst [vmem:[%s21] sm:%s3] %v20
    %v23 = vld [vmem:[%s0] sm:%s3]
    %24 = vst [vmem:[#allocation1] sm:%s3] %v23
    %v25 = vld [vmem:[#allocation1] sm:$0x3]
    %vm26 = vcmask 56320
    %27 = vst.msk [vmem:[#allocation0] ss:$8 sm:$0x3] %vm26, %v25
    %s28 = scalar_lea.vmem [#allocation1], 8
    %v29 = vld [vmem:[%s28] sm:$0x3]
    %vm30 = vcmask 56320
    %s31 = scalar_lea.vmem [#allocation0], 16
    %32 = vst.msk [vmem:[%s31] ss:$8 sm:$0x3] %vm30, %v29
    %s33 = scalar_lea.vmem [#allocation1], 16
    %v34 = vld [vmem:[%s33] sm:$0x3]
    %vm35 = vcmask 56320
    %s36 = scalar_lea.vmem [#allocation0], 32
    %37 = vst.msk [vmem:[%s36] ss:$8 sm:$0x3] %vm35, %v34
    %s38 = scalar_lea.vmem [#allocation1], 24
    %v39 = vld [vmem:[%s38] sm:$0x3]
    %vm40 = vcmask 56320
    %s41 = scalar_lea.vmem [#allocation0], 48
    %42 = vst.msk [vmem:[%s41] ss:$8 sm:$0x3] %vm40, %v39
    %s43 = scalar_lea.vmem [#allocation1], 32
    %v44 = vld [vmem:[%s43] sm:$0x3]
    %vm45 = vcmask 56320
    %s46 = scalar_lea.vmem [#allocation0], 64
    %47 = vst.msk [vmem:[%s46] ss:$8 sm:$0x3] %vm45, %v44
    %v48 = vld.sshfl [vmem:[#allocation1] sm:$0xff pattern:$0x99999810]
    %s49 = scalar_lea.vmem [#allocation1], 16
    %v50 = vld.sshfl [vmem:[%s49] sm:$0xff pattern:$0x98100000]
    %vm51 = vcmask 1047556
    %v52 = vsel %vm51, %v50, %v48
    %53 = vrot.lane.b32.xlu0 %v52, 121
    %v54 = vpop.permute.xlu0 %53
    %vm55 = vcmask 56320
    %s56 = scalar_lea.vmem [#allocation0], 1
    %57 = vst.msk [vmem:[%s56] ss:$8 sm:$0xf] %vm55, %v54
    %s58 = scalar_lea.vmem [#allocation0], 1
    %59 = vst.msk [vmem:[%s58] ss:$8 sm:$0xf0] %vm55, %v54
    %s60 = scalar_lea.vmem [#allocation1], 32
    %v61 = vld [vmem:[%s60] sm:$0x3]
    %62 = vrot.lane.b32.xlu0 %v61, 121
    %v63 = vpop.permute.xlu0 %62
    %vm64 = vcmask 56320
    %s65 = scalar_lea.vmem [#allocation0], 65
    %66 = vst.msk [vmem:[%s65] ss:$8 sm:$0x3] %vm64, %v63
    %s68 = sshllo.u32 0, 2
    %v70 = vld [vmem:[#allocation0] sm:%s68]
    %s71 = sshllo.u32 0, 2
    %72 = vst [vmem:[%s1] sm:%s71] %v70
    %s73 = scalar_lea.vmem [#allocation0], 8
    %v74 = vld [vmem:[%s73] sm:%s68]
    %s75 = sshllo.u32 0, 2
    %s76 = scalar_lea.vmem %s1, 2
    %77 = vst [vmem:[%s76] sm:%s75] %v74
    %s78 = scalar_lea.vmem [#allocation0], 16
    %v79 = vld [vmem:[%s78] sm:%s68]
    %s80 = sshllo.u32 0, 2
    %s81 = smul.addr 2, 2
    %s82 = scalar_lea.vmem %s1, %s81
    %83 = vst [vmem:[%s82] sm:%s80] %v79
    %s84 = scalar_lea.vmem [#allocation0], 24
    %v85 = vld [vmem:[%s84] sm:%s68]
    %s86 = sshllo.u32 0, 2
    %s87 = smul.addr 2, 3
    %s88 = scalar_lea.vmem %s1, %s87
    %89 = vst [vmem:[%s88] sm:%s86] %v85
    %s90 = scalar_lea.vmem [#allocation0], 32
    %v91 = vld [vmem:[%s90] sm:%s68]
    %s92 = sshllo.u32 0, 2
    %s93 = smul.addr 2, 4
    %s94 = scalar_lea.vmem %s1, %s93
    %95 = vst [vmem:[%s94] sm:%s92] %v91
    %s96 = scalar_lea.vmem [#allocation0], 40
    %v97 = vld [vmem:[%s96] sm:%s68]
    %s98 = sshllo.u32 0, 2
    %s99 = smul.addr 2, 5
    %s100 = scalar_lea.vmem %s1, %s99
    %101 = vst [vmem:[%s100] sm:%s98] %v97
    %s102 = scalar_lea.vmem [#allocation0], 48
    %v103 = vld [vmem:[%s102] sm:%s68]
    %s104 = sshllo.u32 0, 2
    %s105 = smul.addr 2, 6
    %s106 = scalar_lea.vmem %s1, %s105
    %107 = vst [vmem:[%s106] sm:%s104] %v103
    %s108 = scalar_lea.vmem [#allocation0], 56
    %v109 = vld [vmem:[%s108] sm:%s68]
    %s110 = sshllo.u32 0, 2
    %s111 = smul.addr 2, 7
    %s112 = scalar_lea.vmem %s1, %s111
    %113 = vst [vmem:[%s112] sm:%s110] %v109
    %s114 = scalar_lea.vmem [#allocation0], 64
    %v115 = vld [vmem:[%s114] sm:%s68]
    %s116 = sshllo.u32 0, 2
    %s117 = smul.addr 2, 8
    %s118 = scalar_lea.vmem %s1, %s117
    %119 = vst [vmem:[%s118] sm:%s116] %v115
    %s120 = scalar_lea.vmem [#allocation0], 72
    %v121 = vld [vmem:[%s120] sm:%s68]
    %s122 = sshllo.u32 0, 2
    %s123 = smul.addr 2, 9
    %s124 = scalar_lea.vmem %s1, %s123
    %125 = vst [vmem:[%s124] sm:%s122] %v121

// kernel: simulation_decoder_forward.1
$region0: #{simulation_decoder_forward.1}
  #allocation0 [shape = 'u32[]', space=smem, size = 0x4, offset = 0x4, fixed_abs, tag = 'smem constant byte address 0x4 - core index']
  #allocation1 [shape = 'u32[144,128]{1,0:T(1,128)}', space=vmem, size = 0x12000, scoped, tag = 'internal scratch']
  %s0 = inlined_call_operand.vmem [shape: f32[2,5,5], index: 0, kind: input, shape index: {}]
  %s1 = inlined_call_operand.vmem [shape: f32[2,2,5,14], index: 1, kind: input, shape index: {}]
  %s2 = inlined_call_operand.vmem [shape: f32[2,2,5,14], index: 2, kind: output, shape index: {}]
  %s3 = sld [smem:[#allocation0]]
  $region41: #{simulation_decoder_forward.1} parent=0
    _
  %s5 = ssub.s32 1, %s3
  %s6 = scalar_select 0, %s5, %s3
  loop: start=0, step=1, limit=4
  $region2: #{simulation_decoder_forward.1} parent=0 // loop_pre_header
    _
  $region3: #{simulation_decoder_forward.1} parent=0 // loop_header
    %s8 = sphi 0, %s12
    %p9 = scmp.ge.s32.totalorder %s8, 4
    %s18 = sphi 0, %s20
    %s21 = sphi 0, %s18
    %s22 = sphi 0, %s21
    %s38 = sphi 0, %s22
    %s44 = sphi 0, %s46
    %s47 = sphi 0, %s44
    %s48 = sphi 0, %s47
    %s64 = sphi 0, %s48
    %s70 = sphi 0, %s72
    %s73 = sphi 0, %s70
    %s74 = sphi 0, %s73
    %s90 = sphi 0, %s74
  $region4: #{simulation_decoder_forward.1} parent=0 // loop_header_branch
    %11 = sbr.rel (%p9) target = $region8
  $region5: #{simulation_decoder_forward.1} parent=0 // loop_body
    %s13 = ssub.s32 %s8, 1
    %s14 = ssub.s32 %s8, 2
    %s15 = sadd.s32 %s8, 1
    %s16 = ssub.s32 %s8, %s15
    %p17 = scmp.eq.s32.totalorder %s16, 0
    %s19 = sadd.s32 %s18, 1
    %s20 = scalar_select %p17, %s18, %s19
    %p23 = pneg %p17
    %p24 = scmp.eq.s32.totalorder %s8, 1
    %p25 = por %p23, %p24
    %p26 = scmp.ne.s32.totalorder %s18, %s21
    %p27 = scmp.eq.s32.totalorder %s8, 0
    %p28 = por %p26, %p27
    %p29 = scmp.ne.s32.totalorder %s18, %s21
    %p30 = scmp.eq.s32.totalorder %s13, 1
    %p31 = por %p29, %p30
    %p32 = scmp.ne.s32.totalorder %s21, %s22
    %p33 = scmp.eq.s32.totalorder %s13, 0
    %p34 = por %p32, %p33
    %p35 = scmp.ne.s32.totalorder %s21, %s22
    %p36 = scmp.eq.s32.totalorder %s14, 1
    %p37 = por %p35, %p36
    %p39 = scmp.ne.s32.totalorder %s22, %s38
    %p40 = scmp.eq.s32.totalorder %s14, 0
    %p41 = por %p39, %p40
    %s42 = ssub.s32 %s8, %s15
    %p43 = scmp.eq.s32.totalorder %s42, 0
    %s45 = sadd.s32 %s44, 1
    %s46 = scalar_select %p43, %s44, %s45
    %p49 = pneg %p43
    %p50 = scmp.eq.s32.totalorder %s8, 1
    %p51 = por %p49, %p50
    %p52 = scmp.ne.s32.totalorder %s44, %s47
    %p53 = scmp.eq.s32.totalorder %s8, 0
    %p54 = por %p52, %p53
    %p55 = scmp.ne.s32.totalorder %s44, %s47
    %p56 = scmp.eq.s32.totalorder %s13, 1
    %p57 = por %p55, %p56
    %p58 = scmp.ne.s32.totalorder %s47, %s48
    %p59 = scmp.eq.s32.totalorder %s13, 0
    %p60 = por %p58, %p59
    %p61 = scmp.ne.s32.totalorder %s47, %s48
    %p62 = scmp.eq.s32.totalorder %s14, 1
    %p63 = por %p61, %p62
    %p65 = scmp.ne.s32.totalorder %s48, %s64
    %p66 = scmp.eq.s32.totalorder %s14, 0
    %p67 = por %p65, %p66
    %s68 = ssub.s32 %s8, %s15
    %p69 = scmp.eq.s32.totalorder %s68, 0
    %s71 = sadd.s32 %s70, 1
    %s72 = scalar_select %p69, %s70, %s71
    %p75 = pneg %p69
    %p76 = scmp.eq.s32.totalorder %s8, 1
    %p77 = por %p75, %p76
    %p78 = scmp.ne.s32.totalorder %s70, %s73
    %p79 = scmp.eq.s32.totalorder %s8, 0
    %p80 = por %p78, %p79
    %p81 = scmp.ne.s32.totalorder %s70, %s73
    %p82 = scmp.eq.s32.totalorder %s13, 1
    %p83 = por %p81, %p82
    %p84 = scmp.ne.s32.totalorder %s73, %s74
    %p85 = scmp.eq.s32.totalorder %s13, 0
    %p86 = por %p84, %p85
    %p87 = scmp.ne.s32.totalorder %s73, %s74
    %p88 = scmp.eq.s32.totalorder %s14, 1
    %p89 = por %p87, %p88
    %p91 = scmp.ne.s32.totalorder %s74, %s90
    %p92 = scmp.eq.s32.totalorder %s14, 0
    %p93 = por %p91, %p92
    %p94 = scmp.le.s32.totalorder 1, %s8
    %p95 = scmp.lt.s32.totalorder %s8, 3
    %p96 = pnand %p94, %p95
    %p97 = pneg %p96
    // Predicated region
    $region9: #{simulation_decoder_forward.1} parent=5 // pred_check
      _
    $region10: #{simulation_decoder_forward.1} parent=5 // pred_check_branch
      %99 = sbr.rel (%p96) target = $region12
    $region11: #{simulation_decoder_forward.1} parent=5 // pred_region
      %s100 = ssub.s32 %s8, 1
    $region12: #{simulation_decoder_forward.1} parent=5 // pred_fallthru
      _
    %p101 = scmp.lt.s32.totalorder %s8, 2
    // Predicated region
    $region13: #{simulation_decoder_forward.1} parent=5 // pred_check
      %p102 = pneg %p101
    $region14: #{simulation_decoder_forward.1} parent=5 // pred_check_branch
      %104 = sbr.rel (%p102) target = $region16
    $region15: #{simulation_decoder_forward.1} parent=5 // pred_region
      // Predicated region
      $region17: #{simulation_decoder_forward.1} parent=15 // pred_check
        %p105 = pneg %p28
      $region18: #{simulation_decoder_forward.1} parent=15 // pred_check_branch
        %107 = sbr.rel (%p105) target = $region20
      $region19: #{simulation_decoder_forward.1} parent=15 // pred_region
        %p108 = scmp.lt.s32.totalorder %s8, 1
        %s109 = scalar_select %p108, %s8, 1
        %s110 = smul.addr %s109, 8
        %s111 = scalar_lea.vmem %s0, %s110
      $region20: #{simulation_decoder_forward.1} parent=15 // pred_fallthru
        _
      // Predicated region
      $region21: #{simulation_decoder_forward.1} parent=15 // pred_check
        %p112 = pneg %p54
      $region22: #{simulation_decoder_forward.1} parent=15 // pred_check_branch
        %114 = sbr.rel (%p112) target = $region24
      $region23: #{simulation_decoder_forward.1} parent=15 // pred_region
        %p115 = scmp.lt.s32.totalorder %s8, 1
        %s116 = scalar_select %p115, %s8, 1
        %s117 = smul.addr %s116, 2
        %s118 = smul.addr %s117, 8
        %s119 = scalar_lea.vmem %s1, %s118
      $region24: #{simulation_decoder_forward.1} parent=15 // pred_fallthru
        _
    $region16: #{simulation_decoder_forward.1} parent=5 // pred_fallthru
      _
    %p120 = scmp.le.s32.totalorder 1, %s8
    %p121 = scmp.lt.s32.totalorder %s8, 3
    %p122 = pnand %p120, %p121
    %p123 = pneg %p122
    // Predicated region
    $region25: #{simulation_decoder_forward.1} parent=5 // pred_check
      _
    $region26: #{simulation_decoder_forward.1} parent=5 // pred_check_branch
      %125 = sbr.rel (%p122) target = $region28
    $region27: #{simulation_decoder_forward.1} parent=5 // pred_region
      %s126 = ssub.s32 %s8, 1
      %p127 = scmp.lt.s32.totalorder %s13, 1
      %s128 = scalar_select %p127, %s13, 1
      %s129 = smul.addr %s128, 8
      %s130 = scalar_lea.vmem %s0, %s129
      %p131 = pneg %p34
      %p132 = pneg %p31
      %p133 = scmp.lt.s32.totalorder %s13, 1
      %s134 = scalar_select %p133, %s13, 1
      %s135 = smul.addr %s134, 2
      %s136 = smul.addr %s135, 8
      %s137 = scalar_lea.vmem %s1, %s136
      %p138 = pneg %p60
      %p139 = pneg %p57
      %p140 = pneg %p86
      %p141 = pneg %p83
      %p142 = scmp.lt.s32.totalorder %s13, 1
      %s143 = scalar_select %p142, %s13, 1
      %s144 = smul.addr %s143, 2
      %s145 = smul.addr %s144, 8
      %s146 = scalar_lea.vmem %s2, %s145
      %p147 = scmp.lt.s32.totalorder %s13, 1
      %s148 = scalar_select %p147, %s13, 1
      %s149 = smul.addr %s148, 8
      %s150 = scalar_lea.vmem %s0, %s149
      %p151 = scmp.lt.s32.totalorder %s13, 1
      %s152 = scalar_select %p151, %s13, 1
      %s153 = smul.addr %s152, 2
      %s154 = smul.addr %s153, 8
      %s155 = scalar_lea.vmem %s1, %s154
      %p156 = scmp.lt.s32.totalorder %s13, 1
      %s157 = scalar_select %p156, %s13, 1
      %s158 = smul.addr %s157, 2
      %s159 = smul.addr %s158, 8
      %s160 = scalar_lea.vmem %s2, %s159
      %v161 = vld [vmem:[%s150] sm:$0x1f]
      %v162 = vmul.f32 %v161, -0.1
      %vm163 = vcmask 36864
      %v164 = vsel %vm163, %v162, 0.0
      %165 = vadd.xlane.f32.xlu0 %v164
      %v166 = vpop.xlane.xlu0 %165
      %v167 = vld [vmem:[%s155] sm:$0x1f]
      %s168 = scalar_lea.vmem %s155, 8
      %v169 = vld [vmem:[%s168] sm:$0x1f]
      %v170 = vadd.f32 %v167, 1.0
      %v171 = vmul.f32 %v170, 0.5
      %v172 = vmul.f32 %v171, 10.0
      %v173 = vadd.f32 %v172, -5.0
      %v174 = vadd.f32 %v169, 1.0
      %v175 = vmul.f32 %v174, 0.5
      %v176 = vmul.f32 %v175, 4.0
      %v177 = vadd.f32 %v176, -2.0
      %v178 = vmul.f32 %v173, %v166
      %vm179 = vcmask 39936
      %v181 = vsel %vm179, %v162, 0
      %vm183 = vcmask 1044480
      %v185 = vsel %vm183, %v173, 0
      %187 = vmatprep.subr.mxu0 0.0
      %188 = vmatpush1.msra.mxu0 %v185
      %189 = vmatprep.subr.mxu0 0.0
      %190 = vmatpush1.msra.mxu0 0.0
      %191 = vmatprep.subr.mxu0 0.0
      %192 = vmatpush1.msra.mxu0 0.0
      %193 = vmatprep.subr.mxu0 0.0
      %194 = vmatpush1.msra.mxu0 0.0
      %195 = vmatprep.subr.mxu0 0.0
      %196 = vmatpush1.msra.mxu0 0.0
      %197 = vmatprep.subr.mxu0 0.0
      %198 = vmatpush1.msra.mxu0 0.0
      %199 = vmatprep.subr.mxu0 0.0
      %200 = vmatpush1.msra.mxu0 0.0
      %201 = vmatprep.subr.mxu0 0.0
      %202 = vmatpush1.msra.mxu0 0.0
      %203 = vmatprep.subr.mxu0 0.0
      %204 = vmatpush1.msra.mxu0 0.0
      %205 = vmatprep.subr.mxu0 0.0
      %206 = vmatpush1.msra.mxu0 0.0
      %207 = vmatprep.subr.mxu0 0.0
      %208 = vmatpush1.msra.mxu0 0.0
      %209 = vmatprep.subr.mxu0 0.0
      %210 = vmatpush1.msra.mxu0 0.0
      %211 = vmatprep.subr.mxu0 0.0
      %212 = vmatpush1.msra.mxu0 0.0
      %213 = vmatprep.subr.mxu0 0.0
      %214 = vmatpush1.msra.mxu0 0.0
      %215 = vmatprep.subr.mxu0 0.0
      %216 = vmatpush1.msra.mxu0 0.0
      %217 = vmatprep.subr.mxu0 0.0
      %218 = vmatpush1.msra.mxu0 0.0
      %219 = vmatprep.subr.mxu0 0.0
      %220 = vmatpush1.msra.mxu0 0.0
      %221 = vmatprep.subr.mxu0 0.0
      %222 = vmatpush1.msra.mxu0 0.0
      %223 = vmatprep.subr.mxu0 0.0
      %224 = vmatpush1.msra.mxu0 0.0
      %225 = vmatprep.subr.mxu0 0.0
      %226 = vmatpush1.msra.mxu0 0.0
      %227 = vmatprep.subr.mxu0 0.0
      %228 = vmatpush1.msra.mxu0 0.0
      %229 = vmatprep.subr.mxu0 0.0
      %230 = vmatpush1.msra.mxu0 0.0
      %231 = vmatprep.subr.mxu0 0.0
      %232 = vmatpush1.msra.mxu0 0.0
      %233 = vmatprep.subr.mxu0 0.0
      %234 = vmatpush1.msra.mxu0 0.0
      %235 = vmatprep.subr.mxu0 0.0
      %236 = vmatpush1.msra.mxu0 0.0
      %237 = vmatprep.subr.mxu0 0.0
      %238 = vmatpush1.msra.mxu0 0.0
      %239 = vmatprep.subr.mxu0 0.0
      %240 = vmatpush1.msra.mxu0 0.0
      %241 = vmatprep.subr.mxu0 0.0
      %242 = vmatpush1.msra.mxu0 0.0
      %243 = vmatprep.subr.mxu0 0.0
      %244 = vmatpush1.msra.mxu0 0.0
      %245 = vmatprep.subr.mxu0 0.0
      %246 = vmatpush1.msra.mxu0 0.0
      %247 = vmatprep.subr.mxu0 0.0
      %248 = vmatpush1.msra.mxu0 0.0
      %249 = vmatprep.subr.mxu0 0.0
      %250 = vmatpush1.msra.mxu0 0.0
      %251 = vmatprep.mubr.f32.mxu0 0.0
      %252 = vmatmul.mubr.f32.gmra.mrb[0].mxu0 %v181
      %v253 = vpop.f32.mrb[0].mxu0
      %v254 = vadd.f32 0.0, %v253
      %v255 = vpop.f32.mrb[0].mxu0
      %256 = vdwg.mxu0
      %v257 = vsub.f32 %v178, %v254
      %v258 = vmul.f32 %v257, 0.1
      %v259 = vadd.f32 %v177, %v258
      %v260 = vmul.f32 %v259, 0.1
      %v261 = vadd.f32 %v173, %v260
      %vm262 = vcmp.gt.f32.partialorder %v261, 5.0
      %v263 = vsub.f32 10.0, %v261
      %v264 = vsel %vm262, %v263, %v261
      %v265 = vand.u32 2147483647, %v259
      %v266 = vsub.f32 0.0, %v265
      %v267 = vsel %vm262, %v266, %v259
      %vm268 = vcmp.lt.f32.partialorder %v264, -5.0
      %v269 = vsub.f32 -10.0, %v264
      %v270 = vsel %vm268, %v269, %v264
      %v271 = vand.u32 2147483647, %v267
      %v272 = vsel %vm268, %v271, %v267
      %v273 = vsub.f32 %v270, -5.0
      %v274 = vmul.f32 %v273, 0.2
      %v275 = vsub.f32 %v274, 1.0
      %v276 = vsub.f32 %v272, -2.0
      %v277 = vmul.f32 %v276, 0.5
      %v278 = vsub.f32 %v277, 1.0
      %vm279 = vcmask 110592
      %280 = vst.msk [vmem:[%s160] sm:$0x1f] %vm279, %v275
      %s281 = scalar_lea.vmem %s160, 8
      %282 = vst.msk [vmem:[%s281] sm:$0x1f] %vm279, %v278
      %p283 = scmp.lt.s32.totalorder %s13, 1
      %s284 = scalar_select %p283, %s13, 1
      %s285 = smul.addr %s284, 2
      %s286 = smul.addr %s285, 8
      %s287 = scalar_lea.vmem %s2, %s286
      // Predicated region
      $region29: #{simulation_decoder_forward.1} parent=27 // pred_check
        %p288 = pneg %p83
      $region30: #{simulation_decoder_forward.1} parent=27 // pred_check_branch
        %290 = sbr.rel (%p288) target = $region32
      $region31: #{simulation_decoder_forward.1} parent=27 // pred_region
        _
      $region32: #{simulation_decoder_forward.1} parent=27 // pred_fallthru
        _
    $region28: #{simulation_decoder_forward.1} parent=5 // pred_fallthru
      _
    %p291 = scmp.le.s32.totalorder 2, %s8
    // Predicated region
    $region33: #{simulation_decoder_forward.1} parent=5 // pred_check
      %p292 = pneg %p291
    $region34: #{simulation_decoder_forward.1} parent=5 // pred_check_branch
      %294 = sbr.rel (%p292) target = $region36
    $region35: #{simulation_decoder_forward.1} parent=5 // pred_region
      %s295 = ssub.s32 %s8, 2
      // Predicated region
      $region37: #{simulation_decoder_forward.1} parent=35 // pred_check
        %p296 = pneg %p89
      $region38: #{simulation_decoder_forward.1} parent=35 // pred_check_branch
        %298 = sbr.rel (%p296) target = $region40
      $region39: #{simulation_decoder_forward.1} parent=35 // pred_region
        %p299 = scmp.lt.s32.totalorder %s14, 1
        %s300 = scalar_select %p299, %s14, 1
        %s301 = smul.addr %s300, 2
        %s302 = smul.addr %s301, 8
        %s303 = scalar_lea.vmem %s2, %s302
      $region40: #{simulation_decoder_forward.1} parent=35 // pred_fallthru
        _
    $region36: #{simulation_decoder_forward.1} parent=5 // pred_fallthru
      _
  $region6: #{simulation_decoder_forward.1} parent=0 // loop_footer
    %s12 = sadd.s32 1, %s8
  $region7: #{simulation_decoder_forward.1} parent=0 // loop_footer_branch
    %7 = sbr.rel target = $region3
  $region8: #{simulation_decoder_forward.1} parent=0 // loop_exit
    _

</llo_original>
